<compile_context>
chip_gen: v5e
topology: v5e:2x2
jax: 0.10.0
libtpu: 0.0.40
codegen_flags: <defaults>
</compile_context>

<pallas_src>
import functools

import jax
import jax.numpy as jnp
from jax import lax
from jax.experimental import pallas as pl
from jax.experimental.pallas import tpu as pltpu


# Network: Linear(4,8)+ReLU, Linear(8,4)+ReLU, Linear(4,2)+ReLU, Linear(2,1)
_DIMS = ((4, 8), (8, 4), (4, 2), (2, 1))
_LANES = 128  # batch elements per lane row


def _param_offsets(dims):
    """Flat offsets of (w, b) for each layer in the packed parameter vector."""
    offs, o = [], 0
    for fan_in, fan_out in dims:
        offs.append((o, o + fan_in * fan_out))
        o += fan_in * fan_out + fan_out
    return tuple(offs), o


_OFFS, _NPARAMS = _param_offsets(_DIMS)  # 89 scalars total


def _round_up(n, m):
    return ((n + m - 1) // m) * m


def _value_mlp_kernel(p_ref, x_ref, o_ref, *, r_blk, ch):
    """Fused 4-layer MLP on one batch block.

    p_ref: SMEM (89,) f32 scalar-prefetch; packed [w1,b1,w2,b2,w3,b3,w4,b4],
           each w row-major (fan_in, fan_out).
    x_ref: VMEM (4, 1, r_blk, 128)  feature planes; batch dense on (sublane, lane)
    o_ref: VMEM (1, r_blk, 128)
    """
    # Hoist all 89 scalar SMEM reads out of the chunk loop (once per grid step).
    w, b = [], []
    for (fan_in, fan_out), (w_off, b_off) in zip(_DIMS, _OFFS):
        w.append([[p_ref[w_off + i * fan_out + j] for j in range(fan_out)]
                  for i in range(fan_in)])
        b.append([p_ref[b_off + j] for j in range(fan_out)])

    n_in0 = _DIMS[0][0]
    n_layers = len(_DIMS)
    n_chunks = r_blk // ch

    def chunk_body(c, carry):
        # `ch` sublane-rows (= ch * 128 batch elements) per chunk; aligned start.
        row0 = pl.multiple_of(c * ch, ch)
        rows = pl.ds(row0, ch)
        # Dense (ch, 128) feature planes — full vreg occupancy.
        h = [x_ref[f, 0, rows, :] for f in range(n_in0)]
        for li, (fan_in, fan_out) in enumerate(_DIMS):
            wi, bi = w[li], b[li]
            nxt = []
            for j in range(fan_out):
                acc = h[0] * wi[0][j]
                for i in range(1, fan_in):
                    acc = acc + h[i] * wi[i][j]
                acc = acc + bi[j]
                if li < n_layers - 1:
                    acc = jnp.maximum(acc, 0.0)  # ReLU on layers 1-3 only
                nxt.append(acc)
            h = nxt
        o_ref[0, rows, :] = h[0]
        return carry

    # fori_loop (not a static Python for): bounds code size and vreg live ranges.
    lax.fori_loop(0, n_chunks, chunk_body, 0)


def value_model_forward(x, params, *, r_blk=512, ch=16):
    """x: (B, 4) float32 -> (B, 1) float32 (same contract as the PyTorch module)."""
    B, d_in = x.shape
    assert d_in == _DIMS[0][0], f"expected input dim {_DIMS[0][0]}, got {d_in}"

    # Pack all parameters into one flat f32 vector (scalar-prefetched into SMEM).
    flat = jnp.concatenate(
        [jnp.concatenate([params[f"w{i}"].reshape(-1).astype(jnp.float32),
                          params[f"b{i}"].reshape(-1).astype(jnp.float32)])
         for i in range(1, len(_DIMS) + 1)])
    assert flat.shape == (_NPARAMS,)

    # Batch-tile selection: large enough to amortize per-grid-step overhead,
    # but capped so mid-size batches still yield >= 2 grid steps (v7x megacore).
    rows_needed = max(8, _round_up(pl.cdiv(B, _LANES), 8))
    r_blk = max(8, min(r_blk, rows_needed))
    if rows_needed >= 16 and r_blk >= rows_needed:
        r_blk = _round_up(pl.cdiv(rows_needed, 2), 8)
    ch = min(ch, r_blk)            # guardrail: keep ch at 8..16 (vreg pressure)
    r_blk = _round_up(r_blk, ch)

    chunk = r_blk * _LANES
    n_blk = pl.cdiv(B, chunk)
    b_pad = n_blk * chunk

    # Lane-dense layout: batch on (sublane, lane); features as leading planes.
    # Single fused pad-of-transpose (no zeros buffer + scatter).
    xt = jnp.pad(x.astype(jnp.float32).T, ((0, 0), (0, b_pad - B)))
    xt = xt.reshape(d_in, n_blk, r_blk, _LANES)

    out = pl.pallas_call(
        functools.partial(_value_mlp_kernel, r_blk=r_blk, ch=ch),
        out_shape=jax.ShapeDtypeStruct((n_blk, r_blk, _LANES), jnp.float32),
        grid_spec=pltpu.PrefetchScalarGridSpec(
            num_scalar_prefetch=1,           # packed params -> SMEM, single copy
            grid=(n_blk,),
            in_specs=[pl.BlockSpec((d_in, 1, r_blk, _LANES),
                                   lambda g, p_ref: (0, g, 0, 0))],
            out_specs=pl.BlockSpec((1, r_blk, _LANES),
                                   lambda g, p_ref: (g, 0, 0)),
        ),
        compiler_params=pltpu.CompilerParams(
            dimension_semantics=("parallel",)),
    )(flat, xt)

    # Back to the public (B, 1) contract (padded tail sliced off).
    return out.reshape(b_pad)[:B].reshape(B, 1)


def init_params(key, input_dim=4):
    """PyTorch-Linear-style init: U(-1/sqrt(fan_in), 1/sqrt(fan_in))."""
    assert input_dim == _DIMS[0][0]
    params = {}
    for i, (fan_in, fan_out) in enumerate(_DIMS, start=1):
        key, kw, kb = jax.random.split(key, 3)
        bound = 1.0 / float(fan_in) ** 0.5
        params[f"w{i}"] = jax.random.uniform(
            kw, (fan_in, fan_out), jnp.float32, -bound, bound)  # stored (in, out)
        params[f"b{i}"] = jax.random.uniform(
            kb, (fan_out,), jnp.float32, -bound, bound)
    return params


def reference_forward(x, params):
    h = x
    for i in range(1, len(_DIMS)):
        h = jnp.maximum(h @ params[f"w{i}"] + params[f"b{i}"], 0.0)
    n = len(_DIMS)
    return h @ params[f"w{n}"] + params[f"b{n}"]


if __name__ == "__main__":
    key = jax.random.PRNGKey(0)
    key, kx, kx2 = jax.random.split(key, 3)

    B, INPUT_DIM = 8, 4
    params = init_params(key, input_dim=INPUT_DIM)

    # Small-batch check (single grid step, single chunk).
    x = jax.random.normal(kx, (B, INPUT_DIM), jnp.float32)
    out = value_model_forward(x, params)
    jax.block_until_ready(out)
    ref = reference_forward(x, params)
    assert out.shape == (B, 1), out.shape
    assert jnp.allclose(out, ref, atol=1e-5, rtol=1e-5), (out, ref)

    # Larger, ragged batch: exercises the multi-chunk fori_loop and the
    # multi-block "parallel" grid (>= 2 steps) plus tail padding.
    B2 = 4099
    x2 = jax.random.normal(kx2, (B2, INPUT_DIM), jnp.float32)
    out2 = value_model_forward(x2, params)
    jax.block_until_ready(out2)
    ref2 = reference_forward(x2, params)
    assert out2.shape == (B2, 1), out2.shape
    assert jnp.allclose(out2, ref2, atol=1e-5, rtol=1e-5)

    print("KERNEL_OK")
</pallas_src>

<mosaic_0001>
module attributes {stable_mosaic.version = 11 : i64} {
  func.func @_value_mlp_kernel(%arg0: i32, %arg1: memref<89xf32, #tpu.memory_space<smem>>, %arg2: memref<4x1x8x128xf32, #tpu.memory_space<vmem>>, %arg3: memref<1x8x128xf32, #tpu.memory_space<vmem>>) attributes {dimension_semantics = [#tpu.dimension_semantics<parallel>], iteration_bounds = array<i64: 1>, scalar_prefetch = 1 : i64, scratch_operands = 0 : i64, tpu.core_type = #tpu.core_type<tc>, window_params = [{transform_indices = @transform_0, window_bounds = array<i64: 4, 1, 8, 128>}, {transform_indices = @transform_1, window_bounds = array<i64: 1, 8, 128>}]} {
    %c0 = arith.constant 0 : index
    %0 = memref.load %arg1[%c0] : memref<89xf32, #tpu.memory_space<smem>>
    %c1 = arith.constant 1 : index
    %1 = memref.load %arg1[%c1] : memref<89xf32, #tpu.memory_space<smem>>
    %c2 = arith.constant 2 : index
    %2 = memref.load %arg1[%c2] : memref<89xf32, #tpu.memory_space<smem>>
    %c3 = arith.constant 3 : index
    %3 = memref.load %arg1[%c3] : memref<89xf32, #tpu.memory_space<smem>>
    %c4 = arith.constant 4 : index
    %4 = memref.load %arg1[%c4] : memref<89xf32, #tpu.memory_space<smem>>
    %c5 = arith.constant 5 : index
    %5 = memref.load %arg1[%c5] : memref<89xf32, #tpu.memory_space<smem>>
    %c6 = arith.constant 6 : index
    %6 = memref.load %arg1[%c6] : memref<89xf32, #tpu.memory_space<smem>>
    %c7 = arith.constant 7 : index
    %7 = memref.load %arg1[%c7] : memref<89xf32, #tpu.memory_space<smem>>
    %c8 = arith.constant 8 : index
    %8 = memref.load %arg1[%c8] : memref<89xf32, #tpu.memory_space<smem>>
    %c9 = arith.constant 9 : index
    %9 = memref.load %arg1[%c9] : memref<89xf32, #tpu.memory_space<smem>>
    %c10 = arith.constant 10 : index
    %10 = memref.load %arg1[%c10] : memref<89xf32, #tpu.memory_space<smem>>
    %c11 = arith.constant 11 : index
    %11 = memref.load %arg1[%c11] : memref<89xf32, #tpu.memory_space<smem>>
    %c12 = arith.constant 12 : index
    %12 = memref.load %arg1[%c12] : memref<89xf32, #tpu.memory_space<smem>>
    %c13 = arith.constant 13 : index
    %13 = memref.load %arg1[%c13] : memref<89xf32, #tpu.memory_space<smem>>
    %c14 = arith.constant 14 : index
    %14 = memref.load %arg1[%c14] : memref<89xf32, #tpu.memory_space<smem>>
    %c15 = arith.constant 15 : index
    %15 = memref.load %arg1[%c15] : memref<89xf32, #tpu.memory_space<smem>>
    %c16 = arith.constant 16 : index
    %16 = memref.load %arg1[%c16] : memref<89xf32, #tpu.memory_space<smem>>
    %c17 = arith.constant 17 : index
    %17 = memref.load %arg1[%c17] : memref<89xf32, #tpu.memory_space<smem>>
    %c18 = arith.constant 18 : index
    %18 = memref.load %arg1[%c18] : memref<89xf32, #tpu.memory_space<smem>>
    %c19 = arith.constant 19 : index
    %19 = memref.load %arg1[%c19] : memref<89xf32, #tpu.memory_space<smem>>
    %c20 = arith.constant 20 : index
    %20 = memref.load %arg1[%c20] : memref<89xf32, #tpu.memory_space<smem>>
    %c21 = arith.constant 21 : index
    %21 = memref.load %arg1[%c21] : memref<89xf32, #tpu.memory_space<smem>>
    %c22 = arith.constant 22 : index
    %22 = memref.load %arg1[%c22] : memref<89xf32, #tpu.memory_space<smem>>
    %c23 = arith.constant 23 : index
    %23 = memref.load %arg1[%c23] : memref<89xf32, #tpu.memory_space<smem>>
    %c24 = arith.constant 24 : index
    %24 = memref.load %arg1[%c24] : memref<89xf32, #tpu.memory_space<smem>>
    %c25 = arith.constant 25 : index
    %25 = memref.load %arg1[%c25] : memref<89xf32, #tpu.memory_space<smem>>
    %c26 = arith.constant 26 : index
    %26 = memref.load %arg1[%c26] : memref<89xf32, #tpu.memory_space<smem>>
    %c27 = arith.constant 27 : index
    %27 = memref.load %arg1[%c27] : memref<89xf32, #tpu.memory_space<smem>>
    %c28 = arith.constant 28 : index
    %28 = memref.load %arg1[%c28] : memref<89xf32, #tpu.memory_space<smem>>
    %c29 = arith.constant 29 : index
    %29 = memref.load %arg1[%c29] : memref<89xf32, #tpu.memory_space<smem>>
    %c30 = arith.constant 30 : index
    %30 = memref.load %arg1[%c30] : memref<89xf32, #tpu.memory_space<smem>>
    %c31 = arith.constant 31 : index
    %31 = memref.load %arg1[%c31] : memref<89xf32, #tpu.memory_space<smem>>
    %c32 = arith.constant 32 : index
    %32 = memref.load %arg1[%c32] : memref<89xf32, #tpu.memory_space<smem>>
    %c33 = arith.constant 33 : index
    %33 = memref.load %arg1[%c33] : memref<89xf32, #tpu.memory_space<smem>>
    %c34 = arith.constant 34 : index
    %34 = memref.load %arg1[%c34] : memref<89xf32, #tpu.memory_space<smem>>
    %c35 = arith.constant 35 : index
    %35 = memref.load %arg1[%c35] : memref<89xf32, #tpu.memory_space<smem>>
    %c36 = arith.constant 36 : index
    %36 = memref.load %arg1[%c36] : memref<89xf32, #tpu.memory_space<smem>>
    %c37 = arith.constant 37 : index
    %37 = memref.load %arg1[%c37] : memref<89xf32, #tpu.memory_space<smem>>
    %c38 = arith.constant 38 : index
    %38 = memref.load %arg1[%c38] : memref<89xf32, #tpu.memory_space<smem>>
    %c39 = arith.constant 39 : index
    %39 = memref.load %arg1[%c39] : memref<89xf32, #tpu.memory_space<smem>>
    %c40 = arith.constant 40 : index
    %40 = memref.load %arg1[%c40] : memref<89xf32, #tpu.memory_space<smem>>
    %c41 = arith.constant 41 : index
    %41 = memref.load %arg1[%c41] : memref<89xf32, #tpu.memory_space<smem>>
    %c42 = arith.constant 42 : index
    %42 = memref.load %arg1[%c42] : memref<89xf32, #tpu.memory_space<smem>>
    %c43 = arith.constant 43 : index
    %43 = memref.load %arg1[%c43] : memref<89xf32, #tpu.memory_space<smem>>
    %c44 = arith.constant 44 : index
    %44 = memref.load %arg1[%c44] : memref<89xf32, #tpu.memory_space<smem>>
    %c45 = arith.constant 45 : index
    %45 = memref.load %arg1[%c45] : memref<89xf32, #tpu.memory_space<smem>>
    %c46 = arith.constant 46 : index
    %46 = memref.load %arg1[%c46] : memref<89xf32, #tpu.memory_space<smem>>
    %c47 = arith.constant 47 : index
    %47 = memref.load %arg1[%c47] : memref<89xf32, #tpu.memory_space<smem>>
    %c48 = arith.constant 48 : index
    %48 = memref.load %arg1[%c48] : memref<89xf32, #tpu.memory_space<smem>>
    %c49 = arith.constant 49 : index
    %49 = memref.load %arg1[%c49] : memref<89xf32, #tpu.memory_space<smem>>
    %c50 = arith.constant 50 : index
    %50 = memref.load %arg1[%c50] : memref<89xf32, #tpu.memory_space<smem>>
    %c51 = arith.constant 51 : index
    %51 = memref.load %arg1[%c51] : memref<89xf32, #tpu.memory_space<smem>>
    %c52 = arith.constant 52 : index
    %52 = memref.load %arg1[%c52] : memref<89xf32, #tpu.memory_space<smem>>
    %c53 = arith.constant 53 : index
    %53 = memref.load %arg1[%c53] : memref<89xf32, #tpu.memory_space<smem>>
    %c54 = arith.constant 54 : index
    %54 = memref.load %arg1[%c54] : memref<89xf32, #tpu.memory_space<smem>>
    %c55 = arith.constant 55 : index
    %55 = memref.load %arg1[%c55] : memref<89xf32, #tpu.memory_space<smem>>
    %c56 = arith.constant 56 : index
    %56 = memref.load %arg1[%c56] : memref<89xf32, #tpu.memory_space<smem>>
    %c57 = arith.constant 57 : index
    %57 = memref.load %arg1[%c57] : memref<89xf32, #tpu.memory_space<smem>>
    %c58 = arith.constant 58 : index
    %58 = memref.load %arg1[%c58] : memref<89xf32, #tpu.memory_space<smem>>
    %c59 = arith.constant 59 : index
    %59 = memref.load %arg1[%c59] : memref<89xf32, #tpu.memory_space<smem>>
    %c60 = arith.constant 60 : index
    %60 = memref.load %arg1[%c60] : memref<89xf32, #tpu.memory_space<smem>>
    %c61 = arith.constant 61 : index
    %61 = memref.load %arg1[%c61] : memref<89xf32, #tpu.memory_space<smem>>
    %c62 = arith.constant 62 : index
    %62 = memref.load %arg1[%c62] : memref<89xf32, #tpu.memory_space<smem>>
    %c63 = arith.constant 63 : index
    %63 = memref.load %arg1[%c63] : memref<89xf32, #tpu.memory_space<smem>>
    %c64 = arith.constant 64 : index
    %64 = memref.load %arg1[%c64] : memref<89xf32, #tpu.memory_space<smem>>
    %c65 = arith.constant 65 : index
    %65 = memref.load %arg1[%c65] : memref<89xf32, #tpu.memory_space<smem>>
    %c66 = arith.constant 66 : index
    %66 = memref.load %arg1[%c66] : memref<89xf32, #tpu.memory_space<smem>>
    %c67 = arith.constant 67 : index
    %67 = memref.load %arg1[%c67] : memref<89xf32, #tpu.memory_space<smem>>
    %c68 = arith.constant 68 : index
    %68 = memref.load %arg1[%c68] : memref<89xf32, #tpu.memory_space<smem>>
    %c69 = arith.constant 69 : index
    %69 = memref.load %arg1[%c69] : memref<89xf32, #tpu.memory_space<smem>>
    %c70 = arith.constant 70 : index
    %70 = memref.load %arg1[%c70] : memref<89xf32, #tpu.memory_space<smem>>
    %c71 = arith.constant 71 : index
    %71 = memref.load %arg1[%c71] : memref<89xf32, #tpu.memory_space<smem>>
    %c72 = arith.constant 72 : index
    %72 = memref.load %arg1[%c72] : memref<89xf32, #tpu.memory_space<smem>>
    %c73 = arith.constant 73 : index
    %73 = memref.load %arg1[%c73] : memref<89xf32, #tpu.memory_space<smem>>
    %c74 = arith.constant 74 : index
    %74 = memref.load %arg1[%c74] : memref<89xf32, #tpu.memory_space<smem>>
    %c75 = arith.constant 75 : index
    %75 = memref.load %arg1[%c75] : memref<89xf32, #tpu.memory_space<smem>>
    %c76 = arith.constant 76 : index
    %76 = memref.load %arg1[%c76] : memref<89xf32, #tpu.memory_space<smem>>
    %c77 = arith.constant 77 : index
    %77 = memref.load %arg1[%c77] : memref<89xf32, #tpu.memory_space<smem>>
    %c78 = arith.constant 78 : index
    %78 = memref.load %arg1[%c78] : memref<89xf32, #tpu.memory_space<smem>>
    %c79 = arith.constant 79 : index
    %79 = memref.load %arg1[%c79] : memref<89xf32, #tpu.memory_space<smem>>
    %c80 = arith.constant 80 : index
    %80 = memref.load %arg1[%c80] : memref<89xf32, #tpu.memory_space<smem>>
    %c81 = arith.constant 81 : index
    %81 = memref.load %arg1[%c81] : memref<89xf32, #tpu.memory_space<smem>>
    %c82 = arith.constant 82 : index
    %82 = memref.load %arg1[%c82] : memref<89xf32, #tpu.memory_space<smem>>
    %c83 = arith.constant 83 : index
    %83 = memref.load %arg1[%c83] : memref<89xf32, #tpu.memory_space<smem>>
    %c84 = arith.constant 84 : index
    %84 = memref.load %arg1[%c84] : memref<89xf32, #tpu.memory_space<smem>>
    %c85 = arith.constant 85 : index
    %85 = memref.load %arg1[%c85] : memref<89xf32, #tpu.memory_space<smem>>
    %c86 = arith.constant 86 : index
    %86 = memref.load %arg1[%c86] : memref<89xf32, #tpu.memory_space<smem>>
    %c87 = arith.constant 87 : index
    %87 = memref.load %arg1[%c87] : memref<89xf32, #tpu.memory_space<smem>>
    %c88 = arith.constant 88 : index
    %88 = memref.load %arg1[%c88] : memref<89xf32, #tpu.memory_space<smem>>
    %c0_i32 = arith.constant 0 : i32
    %c8_i32 = arith.constant 8 : i32
    %89 = arith.muli %c0_i32, %c8_i32 : i32
    %90 = tpu.assume_multiple %89, 8 : i32
    %c0_0 = arith.constant 0 : index
    %c0_1 = arith.constant 0 : index
    %91 = arith.index_cast %90 : i32 to index
    %c0_2 = arith.constant 0 : index
    %92 = vector.load %arg2[%c0_0, %c0_1, %91, %c0_2] : memref<4x1x8x128xf32, #tpu.memory_space<vmem>>, vector<1x1x8x128xf32>
    %93 = vector.shape_cast %92 : vector<1x1x8x128xf32> to vector<8x128xf32>
    %c1_3 = arith.constant 1 : index
    %c0_4 = arith.constant 0 : index
    %94 = arith.index_cast %90 : i32 to index
    %c0_5 = arith.constant 0 : index
    %95 = vector.load %arg2[%c1_3, %c0_4, %94, %c0_5] : memref<4x1x8x128xf32, #tpu.memory_space<vmem>>, vector<1x1x8x128xf32>
    %96 = vector.shape_cast %95 : vector<1x1x8x128xf32> to vector<8x128xf32>
    %c2_6 = arith.constant 2 : index
    %c0_7 = arith.constant 0 : index
    %97 = arith.index_cast %90 : i32 to index
    %c0_8 = arith.constant 0 : index
    %98 = vector.load %arg2[%c2_6, %c0_7, %97, %c0_8] : memref<4x1x8x128xf32, #tpu.memory_space<vmem>>, vector<1x1x8x128xf32>
    %99 = vector.shape_cast %98 : vector<1x1x8x128xf32> to vector<8x128xf32>
    %c3_9 = arith.constant 3 : index
    %c0_10 = arith.constant 0 : index
    %100 = arith.index_cast %90 : i32 to index
    %c0_11 = arith.constant 0 : index
    %101 = vector.load %arg2[%c3_9, %c0_10, %100, %c0_11] : memref<4x1x8x128xf32, #tpu.memory_space<vmem>>, vector<1x1x8x128xf32>
    %102 = vector.shape_cast %101 : vector<1x1x8x128xf32> to vector<8x128xf32>
    %103 = vector.broadcast %0 : f32 to vector<8x128xf32>
    %104 = arith.mulf %93, %103 : vector<8x128xf32>
    %105 = vector.broadcast %8 : f32 to vector<8x128xf32>
    %106 = arith.mulf %96, %105 : vector<8x128xf32>
    %107 = arith.addf %104, %106 : vector<8x128xf32>
    %108 = vector.broadcast %16 : f32 to vector<8x128xf32>
    %109 = arith.mulf %99, %108 : vector<8x128xf32>
    %110 = arith.addf %107, %109 : vector<8x128xf32>
    %111 = vector.broadcast %24 : f32 to vector<8x128xf32>
    %112 = arith.mulf %102, %111 : vector<8x128xf32>
    %113 = arith.addf %110, %112 : vector<8x128xf32>
    %114 = vector.broadcast %32 : f32 to vector<8x128xf32>
    %115 = arith.addf %113, %114 : vector<8x128xf32>
    %cst = arith.constant 0.000000e+00 : f32
    %116 = vector.broadcast %cst : f32 to vector<8x128xf32>
    %117 = arith.maximumf %115, %116 : vector<8x128xf32>
    %118 = vector.broadcast %1 : f32 to vector<8x128xf32>
    %119 = arith.mulf %93, %118 : vector<8x128xf32>
    %120 = vector.broadcast %9 : f32 to vector<8x128xf32>
    %121 = arith.mulf %96, %120 : vector<8x128xf32>
    %122 = arith.addf %119, %121 : vector<8x128xf32>
    %123 = vector.broadcast %17 : f32 to vector<8x128xf32>
    %124 = arith.mulf %99, %123 : vector<8x128xf32>
    %125 = arith.addf %122, %124 : vector<8x128xf32>
    %126 = vector.broadcast %25 : f32 to vector<8x128xf32>
    %127 = arith.mulf %102, %126 : vector<8x128xf32>
    %128 = arith.addf %125, %127 : vector<8x128xf32>
    %129 = vector.broadcast %33 : f32 to vector<8x128xf32>
    %130 = arith.addf %128, %129 : vector<8x128xf32>
    %cst_12 = arith.constant 0.000000e+00 : f32
    %131 = vector.broadcast %cst_12 : f32 to vector<8x128xf32>
    %132 = arith.maximumf %130, %131 : vector<8x128xf32>
    %133 = vector.broadcast %2 : f32 to vector<8x128xf32>
    %134 = arith.mulf %93, %133 : vector<8x128xf32>
    %135 = vector.broadcast %10 : f32 to vector<8x128xf32>
    %136 = arith.mulf %96, %135 : vector<8x128xf32>
    %137 = arith.addf %134, %136 : vector<8x128xf32>
    %138 = vector.broadcast %18 : f32 to vector<8x128xf32>
    %139 = arith.mulf %99, %138 : vector<8x128xf32>
    %140 = arith.addf %137, %139 : vector<8x128xf32>
    %141 = vector.broadcast %26 : f32 to vector<8x128xf32>
    %142 = arith.mulf %102, %141 : vector<8x128xf32>
    %143 = arith.addf %140, %142 : vector<8x128xf32>
    %144 = vector.broadcast %34 : f32 to vector<8x128xf32>
    %145 = arith.addf %143, %144 : vector<8x128xf32>
    %cst_13 = arith.constant 0.000000e+00 : f32
    %146 = vector.broadcast %cst_13 : f32 to vector<8x128xf32>
    %147 = arith.maximumf %145, %146 : vector<8x128xf32>
    %148 = vector.broadcast %3 : f32 to vector<8x128xf32>
    %149 = arith.mulf %93, %148 : vector<8x128xf32>
    %150 = vector.broadcast %11 : f32 to vector<8x128xf32>
    %151 = arith.mulf %96, %150 : vector<8x128xf32>
    %152 = arith.addf %149, %151 : vector<8x128xf32>
    %153 = vector.broadcast %19 : f32 to vector<8x128xf32>
    %154 = arith.mulf %99, %153 : vector<8x128xf32>
    %155 = arith.addf %152, %154 : vector<8x128xf32>
    %156 = vector.broadcast %27 : f32 to vector<8x128xf32>
    %157 = arith.mulf %102, %156 : vector<8x128xf32>
    %158 = arith.addf %155, %157 : vector<8x128xf32>
    %159 = vector.broadcast %35 : f32 to vector<8x128xf32>
    %160 = arith.addf %158, %159 : vector<8x128xf32>
    %cst_14 = arith.constant 0.000000e+00 : f32
    %161 = vector.broadcast %cst_14 : f32 to vector<8x128xf32>
    %162 = arith.maximumf %160, %161 : vector<8x128xf32>
    %163 = vector.broadcast %4 : f32 to vector<8x128xf32>
    %164 = arith.mulf %93, %163 : vector<8x128xf32>
    %165 = vector.broadcast %12 : f32 to vector<8x128xf32>
    %166 = arith.mulf %96, %165 : vector<8x128xf32>
    %167 = arith.addf %164, %166 : vector<8x128xf32>
    %168 = vector.broadcast %20 : f32 to vector<8x128xf32>
    %169 = arith.mulf %99, %168 : vector<8x128xf32>
    %170 = arith.addf %167, %169 : vector<8x128xf32>
    %171 = vector.broadcast %28 : f32 to vector<8x128xf32>
    %172 = arith.mulf %102, %171 : vector<8x128xf32>
    %173 = arith.addf %170, %172 : vector<8x128xf32>
    %174 = vector.broadcast %36 : f32 to vector<8x128xf32>
    %175 = arith.addf %173, %174 : vector<8x128xf32>
    %cst_15 = arith.constant 0.000000e+00 : f32
    %176 = vector.broadcast %cst_15 : f32 to vector<8x128xf32>
    %177 = arith.maximumf %175, %176 : vector<8x128xf32>
    %178 = vector.broadcast %5 : f32 to vector<8x128xf32>
    %179 = arith.mulf %93, %178 : vector<8x128xf32>
    %180 = vector.broadcast %13 : f32 to vector<8x128xf32>
    %181 = arith.mulf %96, %180 : vector<8x128xf32>
    %182 = arith.addf %179, %181 : vector<8x128xf32>
    %183 = vector.broadcast %21 : f32 to vector<8x128xf32>
    %184 = arith.mulf %99, %183 : vector<8x128xf32>
    %185 = arith.addf %182, %184 : vector<8x128xf32>
    %186 = vector.broadcast %29 : f32 to vector<8x128xf32>
    %187 = arith.mulf %102, %186 : vector<8x128xf32>
    %188 = arith.addf %185, %187 : vector<8x128xf32>
    %189 = vector.broadcast %37 : f32 to vector<8x128xf32>
    %190 = arith.addf %188, %189 : vector<8x128xf32>
    %cst_16 = arith.constant 0.000000e+00 : f32
    %191 = vector.broadcast %cst_16 : f32 to vector<8x128xf32>
    %192 = arith.maximumf %190, %191 : vector<8x128xf32>
    %193 = vector.broadcast %6 : f32 to vector<8x128xf32>
    %194 = arith.mulf %93, %193 : vector<8x128xf32>
    %195 = vector.broadcast %14 : f32 to vector<8x128xf32>
    %196 = arith.mulf %96, %195 : vector<8x128xf32>
    %197 = arith.addf %194, %196 : vector<8x128xf32>
    %198 = vector.broadcast %22 : f32 to vector<8x128xf32>
    %199 = arith.mulf %99, %198 : vector<8x128xf32>
    %200 = arith.addf %197, %199 : vector<8x128xf32>
    %201 = vector.broadcast %30 : f32 to vector<8x128xf32>
    %202 = arith.mulf %102, %201 : vector<8x128xf32>
    %203 = arith.addf %200, %202 : vector<8x128xf32>
    %204 = vector.broadcast %38 : f32 to vector<8x128xf32>
    %205 = arith.addf %203, %204 : vector<8x128xf32>
    %cst_17 = arith.constant 0.000000e+00 : f32
    %206 = vector.broadcast %cst_17 : f32 to vector<8x128xf32>
    %207 = arith.maximumf %205, %206 : vector<8x128xf32>
    %208 = vector.broadcast %7 : f32 to vector<8x128xf32>
    %209 = arith.mulf %93, %208 : vector<8x128xf32>
    %210 = vector.broadcast %15 : f32 to vector<8x128xf32>
    %211 = arith.mulf %96, %210 : vector<8x128xf32>
    %212 = arith.addf %209, %211 : vector<8x128xf32>
    %213 = vector.broadcast %23 : f32 to vector<8x128xf32>
    %214 = arith.mulf %99, %213 : vector<8x128xf32>
    %215 = arith.addf %212, %214 : vector<8x128xf32>
    %216 = vector.broadcast %31 : f32 to vector<8x128xf32>
    %217 = arith.mulf %102, %216 : vector<8x128xf32>
    %218 = arith.addf %215, %217 : vector<8x128xf32>
    %219 = vector.broadcast %39 : f32 to vector<8x128xf32>
    %220 = arith.addf %218, %219 : vector<8x128xf32>
    %cst_18 = arith.constant 0.000000e+00 : f32
    %221 = vector.broadcast %cst_18 : f32 to vector<8x128xf32>
    %222 = arith.maximumf %220, %221 : vector<8x128xf32>
    %223 = vector.broadcast %40 : f32 to vector<8x128xf32>
    %224 = arith.mulf %117, %223 : vector<8x128xf32>
    %225 = vector.broadcast %44 : f32 to vector<8x128xf32>
    %226 = arith.mulf %132, %225 : vector<8x128xf32>
    %227 = arith.addf %224, %226 : vector<8x128xf32>
    %228 = vector.broadcast %48 : f32 to vector<8x128xf32>
    %229 = arith.mulf %147, %228 : vector<8x128xf32>
    %230 = arith.addf %227, %229 : vector<8x128xf32>
    %231 = vector.broadcast %52 : f32 to vector<8x128xf32>
    %232 = arith.mulf %162, %231 : vector<8x128xf32>
    %233 = arith.addf %230, %232 : vector<8x128xf32>
    %234 = vector.broadcast %56 : f32 to vector<8x128xf32>
    %235 = arith.mulf %177, %234 : vector<8x128xf32>
    %236 = arith.addf %233, %235 : vector<8x128xf32>
    %237 = vector.broadcast %60 : f32 to vector<8x128xf32>
    %238 = arith.mulf %192, %237 : vector<8x128xf32>
    %239 = arith.addf %236, %238 : vector<8x128xf32>
    %240 = vector.broadcast %64 : f32 to vector<8x128xf32>
    %241 = arith.mulf %207, %240 : vector<8x128xf32>
    %242 = arith.addf %239, %241 : vector<8x128xf32>
    %243 = vector.broadcast %68 : f32 to vector<8x128xf32>
    %244 = arith.mulf %222, %243 : vector<8x128xf32>
    %245 = arith.addf %242, %244 : vector<8x128xf32>
    %246 = vector.broadcast %72 : f32 to vector<8x128xf32>
    %247 = arith.addf %245, %246 : vector<8x128xf32>
    %cst_19 = arith.constant 0.000000e+00 : f32
    %248 = vector.broadcast %cst_19 : f32 to vector<8x128xf32>
    %249 = arith.maximumf %247, %248 : vector<8x128xf32>
    %250 = vector.broadcast %41 : f32 to vector<8x128xf32>
    %251 = arith.mulf %117, %250 : vector<8x128xf32>
    %252 = vector.broadcast %45 : f32 to vector<8x128xf32>
    %253 = arith.mulf %132, %252 : vector<8x128xf32>
    %254 = arith.addf %251, %253 : vector<8x128xf32>
    %255 = vector.broadcast %49 : f32 to vector<8x128xf32>
    %256 = arith.mulf %147, %255 : vector<8x128xf32>
    %257 = arith.addf %254, %256 : vector<8x128xf32>
    %258 = vector.broadcast %53 : f32 to vector<8x128xf32>
    %259 = arith.mulf %162, %258 : vector<8x128xf32>
    %260 = arith.addf %257, %259 : vector<8x128xf32>
    %261 = vector.broadcast %57 : f32 to vector<8x128xf32>
    %262 = arith.mulf %177, %261 : vector<8x128xf32>
    %263 = arith.addf %260, %262 : vector<8x128xf32>
    %264 = vector.broadcast %61 : f32 to vector<8x128xf32>
    %265 = arith.mulf %192, %264 : vector<8x128xf32>
    %266 = arith.addf %263, %265 : vector<8x128xf32>
    %267 = vector.broadcast %65 : f32 to vector<8x128xf32>
    %268 = arith.mulf %207, %267 : vector<8x128xf32>
    %269 = arith.addf %266, %268 : vector<8x128xf32>
    %270 = vector.broadcast %69 : f32 to vector<8x128xf32>
    %271 = arith.mulf %222, %270 : vector<8x128xf32>
    %272 = arith.addf %269, %271 : vector<8x128xf32>
    %273 = vector.broadcast %73 : f32 to vector<8x128xf32>
    %274 = arith.addf %272, %273 : vector<8x128xf32>
    %cst_20 = arith.constant 0.000000e+00 : f32
    %275 = vector.broadcast %cst_20 : f32 to vector<8x128xf32>
    %276 = arith.maximumf %274, %275 : vector<8x128xf32>
    %277 = vector.broadcast %42 : f32 to vector<8x128xf32>
    %278 = arith.mulf %117, %277 : vector<8x128xf32>
    %279 = vector.broadcast %46 : f32 to vector<8x128xf32>
    %280 = arith.mulf %132, %279 : vector<8x128xf32>
    %281 = arith.addf %278, %280 : vector<8x128xf32>
    %282 = vector.broadcast %50 : f32 to vector<8x128xf32>
    %283 = arith.mulf %147, %282 : vector<8x128xf32>
    %284 = arith.addf %281, %283 : vector<8x128xf32>
    %285 = vector.broadcast %54 : f32 to vector<8x128xf32>
    %286 = arith.mulf %162, %285 : vector<8x128xf32>
    %287 = arith.addf %284, %286 : vector<8x128xf32>
    %288 = vector.broadcast %58 : f32 to vector<8x128xf32>
    %289 = arith.mulf %177, %288 : vector<8x128xf32>
    %290 = arith.addf %287, %289 : vector<8x128xf32>
    %291 = vector.broadcast %62 : f32 to vector<8x128xf32>
    %292 = arith.mulf %192, %291 : vector<8x128xf32>
    %293 = arith.addf %290, %292 : vector<8x128xf32>
    %294 = vector.broadcast %66 : f32 to vector<8x128xf32>
    %295 = arith.mulf %207, %294 : vector<8x128xf32>
    %296 = arith.addf %293, %295 : vector<8x128xf32>
    %297 = vector.broadcast %70 : f32 to vector<8x128xf32>
    %298 = arith.mulf %222, %297 : vector<8x128xf32>
    %299 = arith.addf %296, %298 : vector<8x128xf32>
    %300 = vector.broadcast %74 : f32 to vector<8x128xf32>
    %301 = arith.addf %299, %300 : vector<8x128xf32>
    %cst_21 = arith.constant 0.000000e+00 : f32
    %302 = vector.broadcast %cst_21 : f32 to vector<8x128xf32>
    %303 = arith.maximumf %301, %302 : vector<8x128xf32>
    %304 = vector.broadcast %43 : f32 to vector<8x128xf32>
    %305 = arith.mulf %117, %304 : vector<8x128xf32>
    %306 = vector.broadcast %47 : f32 to vector<8x128xf32>
    %307 = arith.mulf %132, %306 : vector<8x128xf32>
    %308 = arith.addf %305, %307 : vector<8x128xf32>
    %309 = vector.broadcast %51 : f32 to vector<8x128xf32>
    %310 = arith.mulf %147, %309 : vector<8x128xf32>
    %311 = arith.addf %308, %310 : vector<8x128xf32>
    %312 = vector.broadcast %55 : f32 to vector<8x128xf32>
    %313 = arith.mulf %162, %312 : vector<8x128xf32>
    %314 = arith.addf %311, %313 : vector<8x128xf32>
    %315 = vector.broadcast %59 : f32 to vector<8x128xf32>
    %316 = arith.mulf %177, %315 : vector<8x128xf32>
    %317 = arith.addf %314, %316 : vector<8x128xf32>
    %318 = vector.broadcast %63 : f32 to vector<8x128xf32>
    %319 = arith.mulf %192, %318 : vector<8x128xf32>
    %320 = arith.addf %317, %319 : vector<8x128xf32>
    %321 = vector.broadcast %67 : f32 to vector<8x128xf32>
    %322 = arith.mulf %207, %321 : vector<8x128xf32>
    %323 = arith.addf %320, %322 : vector<8x128xf32>
    %324 = vector.broadcast %71 : f32 to vector<8x128xf32>
    %325 = arith.mulf %222, %324 : vector<8x128xf32>
    %326 = arith.addf %323, %325 : vector<8x128xf32>
    %327 = vector.broadcast %75 : f32 to vector<8x128xf32>
    %328 = arith.addf %326, %327 : vector<8x128xf32>
    %cst_22 = arith.constant 0.000000e+00 : f32
    %329 = vector.broadcast %cst_22 : f32 to vector<8x128xf32>
    %330 = arith.maximumf %328, %329 : vector<8x128xf32>
    %331 = vector.broadcast %76 : f32 to vector<8x128xf32>
    %332 = arith.mulf %249, %331 : vector<8x128xf32>
    %333 = vector.broadcast %78 : f32 to vector<8x128xf32>
    %334 = arith.mulf %276, %333 : vector<8x128xf32>
    %335 = arith.addf %332, %334 : vector<8x128xf32>
    %336 = vector.broadcast %80 : f32 to vector<8x128xf32>
    %337 = arith.mulf %303, %336 : vector<8x128xf32>
    %338 = arith.addf %335, %337 : vector<8x128xf32>
    %339 = vector.broadcast %82 : f32 to vector<8x128xf32>
    %340 = arith.mulf %330, %339 : vector<8x128xf32>
    %341 = arith.addf %338, %340 : vector<8x128xf32>
    %342 = vector.broadcast %84 : f32 to vector<8x128xf32>
    %343 = arith.addf %341, %342 : vector<8x128xf32>
    %cst_23 = arith.constant 0.000000e+00 : f32
    %344 = vector.broadcast %cst_23 : f32 to vector<8x128xf32>
    %345 = arith.maximumf %343, %344 : vector<8x128xf32>
    %346 = vector.broadcast %77 : f32 to vector<8x128xf32>
    %347 = arith.mulf %249, %346 : vector<8x128xf32>
    %348 = vector.broadcast %79 : f32 to vector<8x128xf32>
    %349 = arith.mulf %276, %348 : vector<8x128xf32>
    %350 = arith.addf %347, %349 : vector<8x128xf32>
    %351 = vector.broadcast %81 : f32 to vector<8x128xf32>
    %352 = arith.mulf %303, %351 : vector<8x128xf32>
    %353 = arith.addf %350, %352 : vector<8x128xf32>
    %354 = vector.broadcast %83 : f32 to vector<8x128xf32>
    %355 = arith.mulf %330, %354 : vector<8x128xf32>
    %356 = arith.addf %353, %355 : vector<8x128xf32>
    %357 = vector.broadcast %85 : f32 to vector<8x128xf32>
    %358 = arith.addf %356, %357 : vector<8x128xf32>
    %cst_24 = arith.constant 0.000000e+00 : f32
    %359 = vector.broadcast %cst_24 : f32 to vector<8x128xf32>
    %360 = arith.maximumf %358, %359 : vector<8x128xf32>
    %361 = vector.broadcast %86 : f32 to vector<8x128xf32>
    %362 = arith.mulf %345, %361 : vector<8x128xf32>
    %363 = vector.broadcast %87 : f32 to vector<8x128xf32>
    %364 = arith.mulf %360, %363 : vector<8x128xf32>
    %365 = arith.addf %362, %364 : vector<8x128xf32>
    %366 = vector.broadcast %88 : f32 to vector<8x128xf32>
    %367 = arith.addf %365, %366 : vector<8x128xf32>
    %c0_25 = arith.constant 0 : index
    %368 = arith.index_cast %90 : i32 to index
    %c0_26 = arith.constant 0 : index
    %369 = vector.load %arg3[%c0_25, %368, %c0_26] : memref<1x8x128xf32, #tpu.memory_space<vmem>>, vector<1x8x128xf32>
    %370 = vector.shape_cast %369 : vector<1x8x128xf32> to vector<8x128xf32>
    %371 = vector.shape_cast %367 : vector<8x128xf32> to vector<1x8x128xf32>
    tpu.vector_store %arg3[%c0_25, %368, %c0_26], %371 {strides = array<i32>} : memref<1x8x128xf32, #tpu.memory_space<vmem>>, vector<1x8x128xf32>,
    %c1_i32 = arith.constant 1 : i32
    return
  }
  func.func @transform_0(%arg0: i32, %arg1: memref<89xf32, #tpu.memory_space<smem>>) -> (i32, i32, i32, i32) {
    %c0_i32 = arith.constant 0 : i32
    %c0_i32_0 = arith.constant 0 : i32
    %c0_i32_1 = arith.constant 0 : i32
    %c0_i32_2 = arith.constant 0 : i32
    return %c0_i32, %arg0, %c0_i32_0, %c0_i32_1 : i32, i32, i32, i32
  }
  func.func @transform_1(%arg0: i32, %arg1: memref<89xf32, #tpu.memory_space<smem>>) -> (i32, i32, i32) {
    %c0_i32 = arith.constant 0 : i32
    %c0_i32_0 = arith.constant 0 : i32
    %c0_i32_1 = arith.constant 0 : i32
    return %arg0, %c0_i32, %c0_i32_0 : i32, i32, i32
  }
}

</mosaic_0001>

<llo_original>
// kernel: tpu_custom_call.1
$region0: #{tpu_custom_call.1}
  #allocation0 [shape = 'u32[]', space=smem, size = 0x4, offset = 0x4, fixed_abs, tag = 'smem constant byte address 0x4 - core index']
  #allocation1 [shape = 'u32[72,128]{1,0:T(1,128)}', space=vmem, size = 0x9000, scoped, tag = 'internal scratch']
  #allocation2 [shape = 's32[1]{0}', space=sflag, size = 0x4, scoped, tag = 'scoped memory for tpu_custom_call.1']
  #allocation3 [shape = 'u8[512]{0}', space=smem, size = 0x200, scoped, tag = 'prefetched SMEM operand 0']
  %s0 = inlined_call_operand.hbm [shape: f32[89], index: 0, kind: input, shape index: {}]
  %s1 = inlined_call_operand.hbm [shape: f32[4,1,8,128], index: 1, kind: input, shape index: {}]
  %s2 = inlined_call_operand.hbm [shape: f32[1,8,128], index: 2, kind: output, shape index: {}]
  %s3 = sld [smem:[#allocation0]]
  $region18: #{tpu_custom_call.1} parent=0
    _
  %s5 = ssub.s32 1, %s3
  %s6 = scalar_select 0, %s5, %s3
  %s8 = sshll.u32 %s0, 4
  %s9 = int_to_ptr.hbm [resolvable:$true] %s8
  %11 = dma.hbm_to_smem %s9, 16, [#allocation3], [#allocation2]
  %13 = dma.done [#allocation2], 16
  %14 = sfence
  $region1: #{tpu_custom_call.1} parent=0
    #allocation4 [shape = 'u8[16384]{0}', space=vmem, size = 0x4000, scoped, tag = 'input window, operand 1, single buffered']
    #allocation5 [shape = 's32[1]{0}', space=sflag, size = 0x4, scoped, tag = 'scoped memory for tpu_custom_call.1']
    #allocation6 [shape = 's32[1]{0}', space=sflag, size = 0x4, scoped, tag = 'scoped memory for tpu_custom_call.1']
    #allocation7 [shape = 'u8[4096]{0}', space=vmem, size = 0x1000, scoped, tag = 'output window, operand 0, single buffered']
    %15 = vsyncpa [#allocation5], 0
    %16 = vsyncpa [#allocation6], 0
    // Predicated region
    $region2: #{tpu_custom_call.1} parent=1 // pred_check
      _
    $region3: #{tpu_custom_call.1} parent=1 // pred_check_branch
      %18 = sbr.rel (0) target = $region5
    $region4: #{tpu_custom_call.1} parent=1 // pred_region
      %20 = vsyncadd [#allocation5], 0
      %s21 = sshll.u32 %s1, 4
      %s22 = int_to_ptr.hbm [resolvable:$true] %s21
      %s23 = sshll.u32 [#allocation4], 4
      %s24 = int_to_ptr.vmem [resolvable:$true] %s23
      %29 = dma.hbm_to_vmem [thread:$0]  %s22, 512, %s24, [#allocation5], 128, 128, 8
    $region5: #{tpu_custom_call.1} parent=1 // pred_fallthru
      _
    // Predicated region
    $region6: #{tpu_custom_call.1} parent=1 // pred_check
      _
    $region7: #{tpu_custom_call.1} parent=1 // pred_check_branch
      %31 = sbr.rel (0) target = $region9
    $region8: #{tpu_custom_call.1} parent=1 // pred_region
      %33 = dma.done [#allocation5], 512
    $region9: #{tpu_custom_call.1} parent=1 // pred_fallthru
      _
    %s34 = sld [smem:[#allocation3]]
    %s35 = sld [smem:[#allocation3 + $0x1]]
    %s36 = sld [smem:[#allocation3 + $0x2]]
    %s37 = sld [smem:[#allocation3 + $0x3]]
    %s38 = sld [smem:[#allocation3 + $0x4]]
    %s39 = sld [smem:[#allocation3 + $0x5]]
    %s40 = sld [smem:[#allocation3 + $0x6]]
    %s41 = sld [smem:[#allocation3 + $0x7]]
    %s42 = sld [smem:[#allocation3 + $0x8]]
    %s43 = sld [smem:[#allocation3 + $0x9]]
    %s44 = sld [smem:[#allocation3 + $0xa]]
    %s45 = sld [smem:[#allocation3 + $0xb]]
    %s46 = sld [smem:[#allocation3 + $0xc]]
    %s47 = sld [smem:[#allocation3 + $0xd]]
    %s48 = sld [smem:[#allocation3 + $0xe]]
    %s49 = sld [smem:[#allocation3 + $0xf]]
    %s50 = sld [smem:[#allocation3 + $0x10]]
    %s51 = sld [smem:[#allocation3 + $0x11]]
    %s52 = sld [smem:[#allocation3 + $0x12]]
    %s53 = sld [smem:[#allocation3 + $0x13]]
    %s54 = sld [smem:[#allocation3 + $0x14]]
    %s55 = sld [smem:[#allocation3 + $0x15]]
    %s56 = sld [smem:[#allocation3 + $0x16]]
    %s57 = sld [smem:[#allocation3 + $0x17]]
    %s58 = sld [smem:[#allocation3 + $0x18]]
    %s59 = sld [smem:[#allocation3 + $0x19]]
    %s60 = sld [smem:[#allocation3 + $0x1a]]
    %s61 = sld [smem:[#allocation3 + $0x1b]]
    %s62 = sld [smem:[#allocation3 + $0x1c]]
    %s63 = sld [smem:[#allocation3 + $0x1d]]
    %s64 = sld [smem:[#allocation3 + $0x1e]]
    %s65 = sld [smem:[#allocation3 + $0x1f]]
    %s66 = sld [smem:[#allocation3 + $0x20]]
    %s67 = sld [smem:[#allocation3 + $0x21]]
    %s68 = sld [smem:[#allocation3 + $0x22]]
    %s69 = sld [smem:[#allocation3 + $0x23]]
    %s70 = sld [smem:[#allocation3 + $0x24]]
    %s71 = sld [smem:[#allocation3 + $0x25]]
    %s72 = sld [smem:[#allocation3 + $0x26]]
    %s73 = sld [smem:[#allocation3 + $0x27]]
    %s74 = sld [smem:[#allocation3 + $0x28]]
    %s75 = sld [smem:[#allocation3 + $0x29]]
    %s76 = sld [smem:[#allocation3 + $0x2a]]
    %s77 = sld [smem:[#allocation3 + $0x2b]]
    %s78 = sld [smem:[#allocation3 + $0x2c]]
    %s79 = sld [smem:[#allocation3 + $0x2d]]
    %s80 = sld [smem:[#allocation3 + $0x2e]]
    %s81 = sld [smem:[#allocation3 + $0x2f]]
    %s82 = sld [smem:[#allocation3 + $0x30]]
    %s83 = sld [smem:[#allocation3 + $0x31]]
    %s84 = sld [smem:[#allocation3 + $0x32]]
    %s85 = sld [smem:[#allocation3 + $0x33]]
    %s86 = sld [smem:[#allocation3 + $0x34]]
    %s87 = sld [smem:[#allocation3 + $0x35]]
    %s88 = sld [smem:[#allocation3 + $0x36]]
    %s89 = sld [smem:[#allocation3 + $0x37]]
    %s90 = sld [smem:[#allocation3 + $0x38]]
    %s91 = sld [smem:[#allocation3 + $0x39]]
    %s92 = sld [smem:[#allocation3 + $0x3a]]
    %s93 = sld [smem:[#allocation3 + $0x3b]]
    %s94 = sld [smem:[#allocation3 + $0x3c]]
    %s95 = sld [smem:[#allocation3 + $0x3d]]
    %s96 = sld [smem:[#allocation3 + $0x3e]]
    %s97 = sld [smem:[#allocation3 + $0x3f]]
    %s98 = sld [smem:[#allocation3 + $0x40]]
    %s99 = sld [smem:[#allocation3 + $0x41]]
    %s100 = sld [smem:[#allocation3 + $0x42]]
    %s101 = sld [smem:[#allocation3 + $0x43]]
    %s102 = sld [smem:[#allocation3 + $0x44]]
    %s103 = sld [smem:[#allocation3 + $0x45]]
    %s104 = sld [smem:[#allocation3 + $0x46]]
    %s105 = sld [smem:[#allocation3 + $0x47]]
    %s106 = sld [smem:[#allocation3 + $0x48]]
    %s107 = sld [smem:[#allocation3 + $0x49]]
    %s108 = sld [smem:[#allocation3 + $0x4a]]
    %s109 = sld [smem:[#allocation3 + $0x4b]]
    %s110 = sld [smem:[#allocation3 + $0x4c]]
    %s111 = sld [smem:[#allocation3 + $0x4d]]
    %s112 = sld [smem:[#allocation3 + $0x4e]]
    %s113 = sld [smem:[#allocation3 + $0x4f]]
    %s114 = sld [smem:[#allocation3 + $0x50]]
    %s115 = sld [smem:[#allocation3 + $0x51]]
    %s116 = sld [smem:[#allocation3 + $0x52]]
    %s117 = sld [smem:[#allocation3 + $0x53]]
    %s118 = sld [smem:[#allocation3 + $0x54]]
    %s119 = sld [smem:[#allocation3 + $0x55]]
    %s120 = sld [smem:[#allocation3 + $0x56]]
    %s121 = sld [smem:[#allocation3 + $0x57]]
    %s122 = sld [smem:[#allocation3 + $0x58]]
    %v123 = vld [vmem:[#allocation4] sm:$0xff]
    %s124 = sadd.s32 0, 8
    %s125 = scalar_lea.vmem [#allocation4], %s124
    %v126 = vld [vmem:[%s125] sm:$0xff]
    %s127 = sadd.s32 0, 16
    %s128 = scalar_lea.vmem [#allocation4], %s127
    %v129 = vld [vmem:[%s128] sm:$0xff]
    %s130 = sadd.s32 0, 24
    %s131 = scalar_lea.vmem [#allocation4], %s130
    %v132 = vld [vmem:[%s131] sm:$0xff]
    %v133 = vstv %s34
    %v134 = vmul.f32 %v123, %v133
    %v135 = vstv %s42
    %v136 = vmul.f32 %v126, %v135
    %v137 = vadd.f32 %v134, %v136
    %v138 = vstv %s50
    %v139 = vmul.f32 %v129, %v138
    %v140 = vadd.f32 %v137, %v139
    %v141 = vstv %s58
    %v142 = vmul.f32 %v132, %v141
    %v143 = vadd.f32 %v140, %v142
    %v144 = vstv %s66
    %v145 = vadd.f32 %v143, %v144
    %v146 = vmax.f32 %v145, 0.0
    %v147 = vstv %s35
    %v148 = vmul.f32 %v123, %v147
    %v149 = vstv %s43
    %v150 = vmul.f32 %v126, %v149
    %v151 = vadd.f32 %v148, %v150
    %v152 = vstv %s51
    %v153 = vmul.f32 %v129, %v152
    %v154 = vadd.f32 %v151, %v153
    %v155 = vstv %s59
    %v156 = vmul.f32 %v132, %v155
    %v157 = vadd.f32 %v154, %v156
    %v158 = vstv %s67
    %v159 = vadd.f32 %v157, %v158
    %v160 = vmax.f32 %v159, 0.0
    %v161 = vstv %s36
    %v162 = vmul.f32 %v123, %v161
    %v163 = vstv %s44
    %v164 = vmul.f32 %v126, %v163
    %v165 = vadd.f32 %v162, %v164
    %v166 = vstv %s52
    %v167 = vmul.f32 %v129, %v166
    %v168 = vadd.f32 %v165, %v167
    %v169 = vstv %s60
    %v170 = vmul.f32 %v132, %v169
    %v171 = vadd.f32 %v168, %v170
    %v172 = vstv %s68
    %v173 = vadd.f32 %v171, %v172
    %v174 = vmax.f32 %v173, 0.0
    %v175 = vstv %s37
    %v176 = vmul.f32 %v123, %v175
    %v177 = vstv %s45
    %v178 = vmul.f32 %v126, %v177
    %v179 = vadd.f32 %v176, %v178
    %v180 = vstv %s53
    %v181 = vmul.f32 %v129, %v180
    %v182 = vadd.f32 %v179, %v181
    %v183 = vstv %s61
    %v184 = vmul.f32 %v132, %v183
    %v185 = vadd.f32 %v182, %v184
    %v186 = vstv %s69
    %v187 = vadd.f32 %v185, %v186
    %v188 = vmax.f32 %v187, 0.0
    %v189 = vstv %s38
    %v190 = vmul.f32 %v123, %v189
    %v191 = vstv %s46
    %v192 = vmul.f32 %v126, %v191
    %v193 = vadd.f32 %v190, %v192
    %v194 = vstv %s54
    %v195 = vmul.f32 %v129, %v194
    %v196 = vadd.f32 %v193, %v195
    %v197 = vstv %s62
    %v198 = vmul.f32 %v132, %v197
    %v199 = vadd.f32 %v196, %v198
    %v200 = vstv %s70
    %v201 = vadd.f32 %v199, %v200
    %v202 = vmax.f32 %v201, 0.0
    %v203 = vstv %s39
    %v204 = vmul.f32 %v123, %v203
    %v205 = vstv %s47
    %v206 = vmul.f32 %v126, %v205
    %v207 = vadd.f32 %v204, %v206
    %v208 = vstv %s55
    %v209 = vmul.f32 %v129, %v208
    %v210 = vadd.f32 %v207, %v209
    %v211 = vstv %s63
    %v212 = vmul.f32 %v132, %v211
    %v213 = vadd.f32 %v210, %v212
    %v214 = vstv %s71
    %v215 = vadd.f32 %v213, %v214
    %v216 = vmax.f32 %v215, 0.0
    %v217 = vstv %s40
    %v218 = vmul.f32 %v123, %v217
    %v219 = vstv %s48
    %v220 = vmul.f32 %v126, %v219
    %v221 = vadd.f32 %v218, %v220
    %v222 = vstv %s56
    %v223 = vmul.f32 %v129, %v222
    %v224 = vadd.f32 %v221, %v223
    %v225 = vstv %s64
    %v226 = vmul.f32 %v132, %v225
    %v227 = vadd.f32 %v224, %v226
    %v228 = vstv %s72
    %v229 = vadd.f32 %v227, %v228
    %v230 = vmax.f32 %v229, 0.0
    %v231 = vstv %s41
    %v232 = vmul.f32 %v123, %v231
    %v233 = vstv %s49
    %v234 = vmul.f32 %v126, %v233
    %v235 = vadd.f32 %v232, %v234
    %v236 = vstv %s57
    %v237 = vmul.f32 %v129, %v236
    %v238 = vadd.f32 %v235, %v237
    %v239 = vstv %s65
    %v240 = vmul.f32 %v132, %v239
    %v241 = vadd.f32 %v238, %v240
    %v242 = vstv %s73
    %v243 = vadd.f32 %v241, %v242
    %v244 = vmax.f32 %v243, 0.0
    %v245 = vstv %s74
    %v246 = vmul.f32 %v146, %v245
    %v247 = vstv %s78
    %v248 = vmul.f32 %v160, %v247
    %v249 = vadd.f32 %v246, %v248
    %v250 = vstv %s82
    %v251 = vmul.f32 %v174, %v250
    %v252 = vadd.f32 %v249, %v251
    %v253 = vstv %s86
    %v254 = vmul.f32 %v188, %v253
    %v255 = vadd.f32 %v252, %v254
    %v256 = vstv %s90
    %v257 = vmul.f32 %v202, %v256
    %v258 = vadd.f32 %v255, %v257
    %v259 = vstv %s94
    %v260 = vmul.f32 %v216, %v259
    %v261 = vadd.f32 %v258, %v260
    %v262 = vstv %s98
    %v263 = vmul.f32 %v230, %v262
    %v264 = vadd.f32 %v261, %v263
    %v265 = vstv %s102
    %v266 = vmul.f32 %v244, %v265
    %v267 = vadd.f32 %v264, %v266
    %v268 = vstv %s106
    %v269 = vadd.f32 %v267, %v268
    %v270 = vmax.f32 %v269, 0.0
    %v271 = vstv %s75
    %v272 = vmul.f32 %v146, %v271
    %v273 = vstv %s79
    %v274 = vmul.f32 %v160, %v273
    %v275 = vadd.f32 %v272, %v274
    %v276 = vstv %s83
    %v277 = vmul.f32 %v174, %v276
    %v278 = vadd.f32 %v275, %v277
    %v279 = vstv %s87
    %v280 = vmul.f32 %v188, %v279
    %v281 = vadd.f32 %v278, %v280
    %v282 = vstv %s91
    %v283 = vmul.f32 %v202, %v282
    %v284 = vadd.f32 %v281, %v283
    %v285 = vstv %s95
    %v286 = vmul.f32 %v216, %v285
    %v287 = vadd.f32 %v284, %v286
    %v288 = vstv %s99
    %v289 = vmul.f32 %v230, %v288
    %v290 = vadd.f32 %v287, %v289
    %v291 = vstv %s103
    %v292 = vmul.f32 %v244, %v291
    %v293 = vadd.f32 %v290, %v292
    %v294 = vstv %s107
    %v295 = vadd.f32 %v293, %v294
    %v296 = vmax.f32 %v295, 0.0
    %v297 = vstv %s76
    %v298 = vmul.f32 %v146, %v297
    %v299 = vstv %s80
    %v300 = vmul.f32 %v160, %v299
    %v301 = vadd.f32 %v298, %v300
    %v302 = vstv %s84
    %v303 = vmul.f32 %v174, %v302
    %v304 = vadd.f32 %v301, %v303
    %v305 = vstv %s88
    %v306 = vmul.f32 %v188, %v305
    %v307 = vadd.f32 %v304, %v306
    %v308 = vstv %s92
    %v309 = vmul.f32 %v202, %v308
    %v310 = vadd.f32 %v307, %v309
    %v311 = vstv %s96
    %v312 = vmul.f32 %v216, %v311
    %v313 = vadd.f32 %v310, %v312
    %v314 = vstv %s100
    %v315 = vmul.f32 %v230, %v314
    %v316 = vadd.f32 %v313, %v315
    %v317 = vstv %s104
    %v318 = vmul.f32 %v244, %v317
    %v319 = vadd.f32 %v316, %v318
    %v320 = vstv %s108
    %v321 = vadd.f32 %v319, %v320
    %v322 = vmax.f32 %v321, 0.0
    %v323 = vstv %s77
    %v324 = vmul.f32 %v146, %v323
    %v325 = vstv %s81
    %v326 = vmul.f32 %v160, %v325
    %v327 = vadd.f32 %v324, %v326
    %v328 = vstv %s85
    %v329 = vmul.f32 %v174, %v328
    %v330 = vadd.f32 %v327, %v329
    %v331 = vstv %s89
    %v332 = vmul.f32 %v188, %v331
    %v333 = vadd.f32 %v330, %v332
    %v334 = vstv %s93
    %v335 = vmul.f32 %v202, %v334
    %v336 = vadd.f32 %v333, %v335
    %v337 = vstv %s97
    %v338 = vmul.f32 %v216, %v337
    %v339 = vadd.f32 %v336, %v338
    %v340 = vstv %s101
    %v341 = vmul.f32 %v230, %v340
    %v342 = vadd.f32 %v339, %v341
    %v343 = vstv %s105
    %v344 = vmul.f32 %v244, %v343
    %v345 = vadd.f32 %v342, %v344
    %v346 = vstv %s109
    %v347 = vadd.f32 %v345, %v346
    %v348 = vmax.f32 %v347, 0.0
    %v349 = vstv %s110
    %v350 = vmul.f32 %v270, %v349
    %v351 = vstv %s112
    %v352 = vmul.f32 %v296, %v351
    %v353 = vadd.f32 %v350, %v352
    %v354 = vstv %s114
    %v355 = vmul.f32 %v322, %v354
    %v356 = vadd.f32 %v353, %v355
    %v357 = vstv %s116
    %v358 = vmul.f32 %v348, %v357
    %v359 = vadd.f32 %v356, %v358
    %v360 = vstv %s118
    %v361 = vadd.f32 %v359, %v360
    %v362 = vmax.f32 %v361, 0.0
    %v363 = vstv %s111
    %v364 = vmul.f32 %v270, %v363
    %v365 = vstv %s113
    %v366 = vmul.f32 %v296, %v365
    %v367 = vadd.f32 %v364, %v366
    %v368 = vstv %s115
    %v369 = vmul.f32 %v322, %v368
    %v370 = vadd.f32 %v367, %v369
    %v371 = vstv %s117
    %v372 = vmul.f32 %v348, %v371
    %v373 = vadd.f32 %v370, %v372
    %v374 = vstv %s119
    %v375 = vadd.f32 %v373, %v374
    %v376 = vmax.f32 %v375, 0.0
    %v377 = vstv %s120
    %v378 = vmul.f32 %v362, %v377
    %v379 = vstv %s121
    %v380 = vmul.f32 %v376, %v379
    %v381 = vadd.f32 %v378, %v380
    %v382 = vstv %s122
    %v383 = vadd.f32 %v381, %v382
    %384 = vst [vmem:[#allocation7] sm:$0xff] %v383
    // Predicated region
    $region10: #{tpu_custom_call.1} parent=1 // pred_check
      _
    $region11: #{tpu_custom_call.1} parent=1 // pred_check_branch
      %386 = sbr.rel (0) target = $region13
    $region12: #{tpu_custom_call.1} parent=1 // pred_region
      %388 = vsyncadd [#allocation6], 0
      %s390 = sshll.u32 [#allocation7], 4
      %s391 = int_to_ptr.vmem [resolvable:$true] %s390
      %s392 = sshll.u32 %s2, 4
      %s393 = int_to_ptr.hbm [resolvable:$true] %s392
      %395 = dma.vmem_to_hbm [thread:$0]  %s391, 128, %s393, [#allocation6]
    $region13: #{tpu_custom_call.1} parent=1 // pred_fallthru
      _
    // Predicated region
    $region14: #{tpu_custom_call.1} parent=1 // pred_check
      _
    $region15: #{tpu_custom_call.1} parent=1 // pred_check_branch
      %397 = sbr.rel (0) target = $region17
    $region16: #{tpu_custom_call.1} parent=1 // pred_region
      %399 = dma.done [#allocation6], 128
    $region17: #{tpu_custom_call.1} parent=1 // pred_fallthru
      _
    %400 = vsyncpa [#allocation5], 1
    %401 = vsyncpa [#allocation6], 1

</llo_original>
